<compile_context>
chip_gen: v5e
topology: v5e:2x2
jax: 0.10.0
libtpu: 0.0.40
codegen_flags: <defaults>
</compile_context>

<pallas_src>
import functools
import math

import jax
import jax.numpy as jnp
from jax import lax
from jax.experimental import pallas as pl
from jax.experimental.pallas import tpu as pltpu


def _round_up(x, m):
    return -(-x // m) * m


def _round_down(x, m):
    return (x // m) * m


def _abs_pos_emb_kernel(q_ref, emb_ref, o_ref, *, mxu_dtype):
    # q_ref: (TM, Dp) f32, emb_ref: (Jp, Dp), o_ref: (TM, Jp)
    q = q_ref[...]
    if mxu_dtype is not None:
        q = q.astype(mxu_dtype)          # in-VMEM cast: hidden under the mem-bound pipeline
    logits = lax.dot_general(
        q, emb_ref[...],
        dimension_numbers=(((1,), (1,)), ((), ())),   # contract last dims, no transpose
        preferred_element_type=jnp.float32)
    o_ref[...] = logits.astype(o_ref.dtype)


def abs_pos_emb(q, height, width, *, mxu_dtype=jnp.bfloat16, out_dtype=None,
                tm_target=512):
    """q: (B, heads, I, d); height: (H, d); width: (W, d) -> (B, heads, I, H*W)."""
    B, nh, I, d = q.shape
    H, dh = height.shape
    W, dw = width.shape
    assert dh == d and dw == d
    J = H * W
    M = B * nh * I
    out_dtype = q.dtype if out_dtype is None else out_dtype

    # --- hoisted, one-time embedding table (J, d) ---
    emb = (height[:, None, :] + width[None, :, :]).reshape(J, d)

    # --- lane-dense output strategy ---------------------------------------
    # (a) pack: fold `pack` q rows per kernel row, contract against a
    #     block-diagonal (pack*J, pack*d) emb -> output last dim pack*J % 128 == 0.
    pack = 1
    if J % 128 != 0:
        cand = 128 // math.gcd(J, 128)
        if cand * d <= 128 and M % cand == 0:
            pack = cand

    if pack > 1:
        Jp, Dp, Mp = pack * J, pack * d, M // pack
        emb_k = jnp.zeros((Jp, Dp), emb.dtype)
        for p in range(pack):
            emb_k = emb_k.at[p * J:(p + 1) * J, p * d:(p + 1) * d].set(emb)
        j_pad = 0
    else:
        Dp, Mp = d, M
        Jp = J
        emb_k = emb
        j_pad = 0
        # (b) pad: zero rows to the next multiple of 128 when modest (<~35%).
        if J % 128 != 0:
            Jr = _round_up(J, 128)
            if 100 * (Jr - J) <= 35 * J:
                j_pad = Jr - J
                Jp = Jr
                emb_k = jnp.pad(emb_k, ((0, j_pad), (0, 0)))
        # (c) else: full-extent (masked-store) fallback — still correct.

    q2 = q.reshape(Mp, Dp)                      # contiguous, free view
    if mxu_dtype is not None:
        emb_k = emb_k.astype(mxu_dtype)         # tiny one-time cast; halves resident VMEM

    # --- row-tile selection -------------------------------------------------
    q_itemsize = q2.dtype.itemsize              # q stays in its HBM dtype (cast in kernel)
    out_itemsize = jnp.dtype(out_dtype).itemsize
    emb_bytes = 2 * Jp * Dp * emb_k.dtype.itemsize          # resident, double-buffered
    block_budget = (24 << 20) - emb_bytes                   # safe on v5e/v6e/v7x scoped VMEM
    bytes_per_row = 2 * (Dp * q_itemsize + Jp * out_itemsize)  # double-buffered in + out
    tm_cap = max(16, _round_down(block_budget // max(bytes_per_row, 1), 16))
    tm = max(16, _round_down(min(tm_target, tm_cap), 16))
    # guarantee >= 2 grid steps whenever possible (v7x megacore: both TCs work)
    if Mp >= 32:
        tm = min(tm, max(16, _round_up(Mp // 2, 16)))
    tm = min(tm, _round_up(Mp, 16))             # never larger than (padded) M

    Mr = pl.cdiv(Mp, tm) * tm
    if Mr != Mp:
        q2 = jnp.pad(q2, ((0, Mr - Mp), (0, 0)))            # zero rows, sliced off below
    grid = (Mr // tm,)

    block_bytes = 2 * tm * (Dp * q_itemsize + Jp * out_itemsize) + emb_bytes
    vmem_limit = int(min(48 << 20, max(32 << 20, block_bytes + (8 << 20))))

    cost = pl.CostEstimate(
        flops=2 * Mr * Jp * Dp,
        transcendentals=0,
        bytes_accessed=Mr * Dp * q_itemsize + Jp * Dp * emb_k.dtype.itemsize
        + Mr * Jp * out_itemsize)

    out = pl.pallas_call(
        functools.partial(_abs_pos_emb_kernel, mxu_dtype=mxu_dtype),
        out_shape=jax.ShapeDtypeStruct((Mr, Jp), out_dtype),
        grid_spec=pltpu.PrefetchScalarGridSpec(
            num_scalar_prefetch=0,
            grid=grid,
            in_specs=[
                pl.BlockSpec((tm, Dp), lambda g: (g, 0)),   # q row tile
                pl.BlockSpec((Jp, Dp), lambda g: (0, 0)),   # emb resident (never re-DMA'd)
            ],
            out_specs=pl.BlockSpec((tm, Jp), lambda g: (g, 0)),
        ),
        compiler_params=pltpu.CompilerParams(
            dimension_semantics=("parallel",),              # M axis shardable across TCs
            vmem_limit_bytes=vmem_limit),
        cost_estimate=cost,
    )(q2, emb_k)

    # undo row padding / packing / column padding (all contiguous views or slices)
    out = out[:Mp]
    if pack > 1:
        out = out.reshape(M, J)                 # (Mp, pack*J) -> (M, J), free
    elif j_pad > 0:
        out = out[:, :J]
    return out.reshape(B, nh, I, J)


if __name__ == "__main__":
    # Small, deterministic setup consistent with the module's __init__/forward.
    fmap_size = 8                   # H = W = 8  -> J = 64
    dim_head = 32
    batch, heads = 2, 4
    seq_i = fmap_size * fmap_size   # q's 'i' axis (= H*W)

    key = jax.random.PRNGKey(0)
    k_h, k_w, k_q = jax.random.split(key, 3)
    scale = dim_head ** (-0.5)

    height = jax.random.normal(k_h, (fmap_size, dim_head), jnp.float32) * scale
    width = jax.random.normal(k_w, (fmap_size, dim_head), jnp.float32) * scale
    q = jax.random.normal(k_q, (batch, heads, seq_i, dim_head), jnp.float32)

    logits = jax.block_until_ready(abs_pos_emb(q, height, width))
    assert logits.shape == (batch, heads, seq_i, fmap_size * fmap_size)

    emb_ref = (height[:, None, :] + width[None, :, :]).reshape(-1, dim_head)

    # Check 1: same bf16 operand rounding as the kernel's MXU path (tight).
    ref_bf16 = jnp.einsum('bhid,jd->bhij',
                          q.astype(jnp.bfloat16), emb_ref.astype(jnp.bfloat16),
                          preferred_element_type=jnp.float32)
    assert jnp.allclose(logits, ref_bf16, atol=1e-3, rtol=1e-3)

    # Check 2: full-f32 module semantics (loose tolerance due to bf16 operands).
    ref_f32 = jnp.einsum('bhid,jd->bhij', q, emb_ref)
    assert jnp.allclose(logits, ref_f32, atol=5e-2, rtol=5e-2)

    # Check 3: pure-f32 kernel path matches the f32 reference tightly.
    logits_f32 = jax.block_until_ready(abs_pos_emb(q, height, width, mxu_dtype=None))
    assert jnp.allclose(logits_f32, ref_f32, atol=1e-4, rtol=1e-4)

    print("KERNEL_OK")
</pallas_src>

<mosaic_0001>
module attributes {stable_mosaic.version = 11 : i64} {
  func.func @_abs_pos_emb_kernel(%arg0: i32, %arg1: memref<128x64xf32, #tpu.memory_space<vmem>>, %arg2: memref<128x64xbf16, #tpu.memory_space<vmem>>, %arg3: memref<128x128xf32, #tpu.memory_space<vmem>>) attributes {dimension_semantics = [#tpu.dimension_semantics<parallel>], iteration_bounds = array<i64: 2>, scalar_prefetch = 0 : i64, scratch_operands = 0 : i64, tpu.core_type = #tpu.core_type<tc>, window_params = [{transform_indices = @transform_0, window_bounds = array<i64: 128, 64>}, {pipeline_mode = #tpu.pipeline_mode<synchronous>, transform_indices = @transform_1, window_bounds = array<i64: 128, 64>}, {transform_indices = @transform_2, window_bounds = array<i64: 128, 128>}]} {
    %c0 = arith.constant 0 : index
    %c0_0 = arith.constant 0 : index
    %0 = vector.load %arg1[%c0, %c0_0] : memref<128x64xf32, #tpu.memory_space<vmem>>, vector<128x64xf32>
    %1 = arith.truncf %0 : vector<128x64xf32> to vector<128x64xbf16>
    %c0_1 = arith.constant 0 : index
    %c0_2 = arith.constant 0 : index
    %2 = vector.load %arg2[%c0_1, %c0_2] : memref<128x64xbf16, #tpu.memory_space<vmem>>, vector<128x64xbf16>
    %cst = arith.constant dense<0.000000e+00> : vector<128x128xf32>
    %3 = tpu.matmul %1, %2, %cst {dimension_numbers = #tpu.dot_dimension_numbers<[1], [1], [0], [0], [0, 0, 1, 0], [], []>} : vector<128x64xbf16>, vector<128x64xbf16>, vector<128x128xf32> -> vector<128x128xf32>
    %c0_3 = arith.constant 0 : index
    %c0_4 = arith.constant 0 : index
    %4 = vector.load %arg3[%c0_3, %c0_4] : memref<128x128xf32, #tpu.memory_space<vmem>>, vector<128x128xf32>
    tpu.vector_store %arg3[%c0_3, %c0_4], %3 {strides = array<i32>} : memref<128x128xf32, #tpu.memory_space<vmem>>, vector<128x128xf32>,
    return
  }
  func.func @transform_0(%arg0: i32) -> (i32, i32) {
    %c0_i32 = arith.constant 0 : i32
    %c0_i32_0 = arith.constant 0 : i32
    return %arg0, %c0_i32 : i32, i32
  }
  func.func @transform_1(%arg0: i32) -> (i32, i32) {
    %c0_i32 = arith.constant 0 : i32
    %c0_i32_0 = arith.constant 0 : i32
    %c0_i32_1 = arith.constant 0 : i32
    return %c0_i32, %c0_i32_0 : i32, i32
  }
  func.func @transform_2(%arg0: i32) -> (i32, i32) {
    %c0_i32 = arith.constant 0 : i32
    %c0_i32_0 = arith.constant 0 : i32
    return %arg0, %c0_i32 : i32, i32
  }
}

</mosaic_0001>

<llo_original>
// kernel: tpu_custom_call.1
$region0: #{tpu_custom_call.1}
  #allocation0 [shape = 'u32[]', space=smem, size = 0x4, offset = 0x4, fixed_abs, tag = 'smem constant byte address 0x4 - core index']
  #allocation1 [shape = 'u32[72,128]{1,0:T(1,128)}', space=vmem, size = 0x9000, scoped, tag = 'internal scratch']
  %s0 = inlined_call_operand.vmem [shape: f32[256,64], index: 0, kind: input, shape index: {}]
  %s1 = inlined_call_operand.vmem [shape: bf16[128,64], index: 1, kind: input, shape index: {}]
  %s2 = inlined_call_operand.hbm [shape: f32[256,128], index: 2, kind: output, shape index: {}]
  %s3 = sld [smem:[#allocation0]]
  $region41: #{tpu_custom_call.1} parent=0
    _
  %s5 = ssub.s32 1, %s3
  %s6 = scalar_select 0, %s5, %s3
  $region1: #{tpu_custom_call.1} parent=0
    #allocation2 [shape = 'u8[131072]{0}', space=vmem, size = 0x20000, scoped, tag = 'output window, operand 0']
    #allocation3 [shape = 's32[2]{0}', space=sflag, size = 0x8, scoped, tag = 'scoped memory for tpu_custom_call.1']
    %7 = vsyncpa [#allocation3], 0
    %s8 = scalar_lea.sflag [#allocation3], 1
    %9 = vsyncpa %s8, 0
    loop: start=0, step=1, limit=4
    $region2: #{tpu_custom_call.1} parent=1 // loop_pre_header
      _
    $region3: #{tpu_custom_call.1} parent=1 // loop_header
      %s11 = sphi 0, %s15
      %p12 = scmp.ge.s32.totalorder %s11, 4
      %s21 = sphi 0, %s23
      %s24 = sphi 0, %s21
      %s25 = sphi 0, %s24
      %s41 = sphi 0, %s25
      %s45 = sphi 0, %s45
      %s47 = sphi 0, %s45
      %s48 = sphi 0, %s47
      %s62 = sphi 0, %s48
      %s68 = sphi 0, %s70
      %s71 = sphi 0, %s68
      %s72 = sphi 0, %s71
      %s88 = sphi 0, %s72
    $region4: #{tpu_custom_call.1} parent=1 // loop_header_branch
      %14 = sbr.rel (%p12) target = $region8
    $region5: #{tpu_custom_call.1} parent=1 // loop_body
      %s16 = ssub.s32 %s11, 1
      %s17 = ssub.s32 %s11, 2
      %s18 = sadd.s32 %s11, 1
      %s19 = ssub.s32 %s11, %s18
      %p20 = scmp.eq.s32.totalorder %s19, 0
      %s22 = sadd.s32 %s21, 1
      %s23 = scalar_select %p20, %s21, %s22
      %p26 = pneg %p20
      %p27 = scmp.eq.s32.totalorder %s11, 1
      %p28 = por %p26, %p27
      %p29 = scmp.ne.s32.totalorder %s21, %s24
      %p30 = scmp.eq.s32.totalorder %s11, 0
      %p31 = por %p29, %p30
      %p32 = scmp.ne.s32.totalorder %s21, %s24
      %p33 = scmp.eq.s32.totalorder %s16, 1
      %p34 = por %p32, %p33
      %p35 = scmp.ne.s32.totalorder %s24, %s25
      %p36 = scmp.eq.s32.totalorder %s16, 0
      %p37 = por %p35, %p36
      %p38 = scmp.ne.s32.totalorder %s24, %s25
      %p39 = scmp.eq.s32.totalorder %s17, 1
      %p40 = por %p38, %p39
      %p42 = scmp.ne.s32.totalorder %s25, %s41
      %p43 = scmp.eq.s32.totalorder %s17, 0
      %p44 = por %p42, %p43
      %s46 = sadd.s32 %s45, 1
      %p49 = scmp.eq.s32.totalorder %s11, 1
      %p50 = scmp.ne.s32.totalorder %s45, %s47
      %p51 = scmp.eq.s32.totalorder %s11, 0
      %p52 = por %p50, %p51
      %p53 = scmp.ne.s32.totalorder %s45, %s47
      %p54 = scmp.eq.s32.totalorder %s16, 1
      %p55 = por %p53, %p54
      %p56 = scmp.ne.s32.totalorder %s47, %s48
      %p57 = scmp.eq.s32.totalorder %s16, 0
      %p58 = por %p56, %p57
      %p59 = scmp.ne.s32.totalorder %s47, %s48
      %p60 = scmp.eq.s32.totalorder %s17, 1
      %p61 = por %p59, %p60
      %p63 = scmp.ne.s32.totalorder %s48, %s62
      %p64 = scmp.eq.s32.totalorder %s17, 0
      %p65 = por %p63, %p64
      %s66 = ssub.s32 %s11, %s18
      %p67 = scmp.eq.s32.totalorder %s66, 0
      %s69 = sadd.s32 %s68, 1
      %s70 = scalar_select %p67, %s68, %s69
      %p73 = pneg %p67
      %p74 = scmp.eq.s32.totalorder %s11, 1
      %p75 = por %p73, %p74
      %p76 = scmp.ne.s32.totalorder %s68, %s71
      %p77 = scmp.eq.s32.totalorder %s11, 0
      %p78 = por %p76, %p77
      %p79 = scmp.ne.s32.totalorder %s68, %s71
      %p80 = scmp.eq.s32.totalorder %s16, 1
      %p81 = por %p79, %p80
      %p82 = scmp.ne.s32.totalorder %s71, %s72
      %p83 = scmp.eq.s32.totalorder %s16, 0
      %p84 = por %p82, %p83
      %p85 = scmp.ne.s32.totalorder %s71, %s72
      %p86 = scmp.eq.s32.totalorder %s17, 1
      %p87 = por %p85, %p86
      %p89 = scmp.ne.s32.totalorder %s72, %s88
      %p90 = scmp.eq.s32.totalorder %s17, 0
      %p91 = por %p89, %p90
      %p92 = scmp.le.s32.totalorder 1, %s11
      %p93 = scmp.lt.s32.totalorder %s11, 3
      %p94 = pnand %p92, %p93
      %p95 = pneg %p94
      // Predicated region
      $region9: #{tpu_custom_call.1} parent=5 // pred_check
        _
      $region10: #{tpu_custom_call.1} parent=5 // pred_check_branch
        %97 = sbr.rel (%p94) target = $region12
      $region11: #{tpu_custom_call.1} parent=5 // pred_region
        %s98 = ssub.s32 %s11, 1
        // Predicated region
        $region13: #{tpu_custom_call.1} parent=11 // pred_check
          %p99 = pneg %p58
        $region14: #{tpu_custom_call.1} parent=11 // pred_check_branch
          %101 = sbr.rel (%p99) target = $region16
        $region15: #{tpu_custom_call.1} parent=11 // pred_region
          _
        $region16: #{tpu_custom_call.1} parent=11 // pred_fallthru
          _
      $region12: #{tpu_custom_call.1} parent=5 // pred_fallthru
        _
      %p102 = scmp.lt.s32.totalorder %s11, 2
      // Predicated region
      $region17: #{tpu_custom_call.1} parent=5 // pred_check
        %p103 = pneg %p102
      $region18: #{tpu_custom_call.1} parent=5 // pred_check_branch
        %105 = sbr.rel (%p103) target = $region20
      $region19: #{tpu_custom_call.1} parent=5 // pred_region
        // Predicated region
        $region21: #{tpu_custom_call.1} parent=19 // pred_check
          %p106 = pneg %p31
        $region22: #{tpu_custom_call.1} parent=19 // pred_check_branch
          %108 = sbr.rel (%p106) target = $region24
        $region23: #{tpu_custom_call.1} parent=19 // pred_region
          %s109 = smul.u32 16, %s11
          %p110 = scmp.lt.s32.totalorder %s109, 31
          %s111 = scalar_select %p110, %s109, 31
          %s112 = smul.addr %s111, 8
          %s113 = scalar_lea.vmem %s0, %s112
          %s114 = smul.u32 16, %s11
        $region24: #{tpu_custom_call.1} parent=19 // pred_fallthru
          _
      $region20: #{tpu_custom_call.1} parent=5 // pred_fallthru
        _
      %p115 = scmp.le.s32.totalorder 1, %s11
      %p116 = scmp.lt.s32.totalorder %s11, 3
      %p117 = pnand %p115, %p116
      %p118 = pneg %p117
      // Predicated region
      $region25: #{tpu_custom_call.1} parent=5 // pred_check
        _
      $region26: #{tpu_custom_call.1} parent=5 // pred_check_branch
        %120 = sbr.rel (%p117) target = $region28
      $region27: #{tpu_custom_call.1} parent=5 // pred_region
        %s121 = ssub.s32 %s11, 1
        %s122 = smul.u32 16, %s16
        %p123 = scmp.lt.s32.totalorder %s122, 31
        %s124 = scalar_select %p123, %s122, 31
        %s125 = smul.addr %s124, 8
        %s126 = scalar_lea.vmem %s0, %s125
        %p127 = pneg %p37
        %p128 = pneg %p34
        %p129 = pneg %p58
        %p130 = pneg %p55
        %p131 = pneg %p84
        %p132 = pneg %p81
        %s133 = sand.u32 %s71, 1
        %s134 = scalar_lea.sflag [#allocation3], %s133
        %s135 = sand.u32 %s71, 1
        %s136 = smul.addr %s135, 128
        %s137 = scalar_lea.vmem [#allocation2], %s136
        %s138 = smul.u32 16, %s16
        %p139 = scmp.lt.s32.totalorder %s138, 31
        %s140 = scalar_select %p139, %s138, 31
        %s141 = smul.addr %s140, 8
        %s142 = scalar_lea.vmem %s0, %s141
        %s143 = smul.u32 16, %s16
        %s144 = smul.u32 16, %s16
        %v145 = vld [vmem:[%s142] sm:$0xff]
        %v146 = vld [vmem:[%s142 + $0x8] sm:$0xff]
        %v147 = vld [vmem:[%s142 + $0x10] sm:$0xff]
        %v148 = vld [vmem:[%s142 + $0x18] sm:$0xff]
        %v149 = vld [vmem:[%s142 + $0x20] sm:$0xff]
        %v150 = vld [vmem:[%s142 + $0x28] sm:$0xff]
        %v151 = vld [vmem:[%s142 + $0x30] sm:$0xff]
        %v152 = vld [vmem:[%s142 + $0x38] sm:$0xff]
        %v153 = vld [vmem:[%s142 + $0x40] sm:$0xff]
        %v154 = vld [vmem:[%s142 + $0x48] sm:$0xff]
        %v155 = vld [vmem:[%s142 + $0x50] sm:$0xff]
        %v156 = vld [vmem:[%s142 + $0x58] sm:$0xff]
        %v157 = vld [vmem:[%s142 + $0x60] sm:$0xff]
        %v158 = vld [vmem:[%s142 + $0x68] sm:$0xff]
        %v159 = vld [vmem:[%s142 + $0x70] sm:$0xff]
        %v160 = vld [vmem:[%s142 + $0x78] sm:$0xff]
        %v161 = vpack.c.bf16 %v146, %v145
        %v162 = vpack.c.bf16 %v148, %v147
        %v163 = vpack.c.bf16 %v150, %v149
        %v164 = vpack.c.bf16 %v152, %v151
        %v165 = vpack.c.bf16 %v154, %v153
        %v166 = vpack.c.bf16 %v156, %v155
        %v167 = vpack.c.bf16 %v158, %v157
        %v168 = vpack.c.bf16 %v160, %v159
        %v169 = vld [vmem:[%s1] sm:$0xf]
        %v170 = vld [vmem:[%s1 + $0x4] sm:$0xf]
        %v171 = vld [vmem:[%s1 + $0x8] sm:$0xf]
        %v172 = vld [vmem:[%s1 + $0xc] sm:$0xf]
        %v173 = vld [vmem:[%s1 + $0x10] sm:$0xf]
        %v174 = vld [vmem:[%s1 + $0x14] sm:$0xf]
        %v175 = vld [vmem:[%s1 + $0x18] sm:$0xf]
        %v176 = vld [vmem:[%s1 + $0x1c] sm:$0xf]
        %v177 = vld [vmem:[%s1 + $0x20] sm:$0xf]
        %v178 = vld [vmem:[%s1 + $0x24] sm:$0xf]
        %v179 = vld [vmem:[%s1 + $0x28] sm:$0xf]
        %v180 = vld [vmem:[%s1 + $0x2c] sm:$0xf]
        %v181 = vld [vmem:[%s1 + $0x30] sm:$0xf]
        %v182 = vld [vmem:[%s1 + $0x34] sm:$0xf]
        %v183 = vld [vmem:[%s1 + $0x38] sm:$0xf]
        %v184 = vld [vmem:[%s1 + $0x3c] sm:$0xf]
        %v201 = vunpack.c.l.b16 %v169
        %v202 = vunpack.c.l.b16 %v170
        %v203 = vunpack.c.l.b16 %v171
        %v204 = vunpack.c.l.b16 %v172
        %v205 = vunpack.c.l.b16 %v173
        %v206 = vunpack.c.l.b16 %v174
        %v207 = vunpack.c.l.b16 %v175
        %v208 = vunpack.c.l.b16 %v176
        %v209 = vunpack.c.l.b16 %v177
        %v210 = vunpack.c.l.b16 %v178
        %v211 = vunpack.c.l.b16 %v179
        %v212 = vunpack.c.l.b16 %v180
        %v213 = vunpack.c.l.b16 %v181
        %v214 = vunpack.c.l.b16 %v182
        %v215 = vunpack.c.l.b16 %v183
        %v216 = vunpack.c.l.b16 %v184
        %v217 = vpack.c.b16 %v202, %v201
        %v218 = vpack.c.b16 %v204, %v203
        %v219 = vpack.c.b16 %v206, %v205
        %v220 = vpack.c.b16 %v208, %v207
        %v221 = vpack.c.b16 %v210, %v209
        %v222 = vpack.c.b16 %v212, %v211
        %v223 = vpack.c.b16 %v214, %v213
        %v224 = vpack.c.b16 %v216, %v215
        %vm225 = vcmask 523264
        %v227 = vsel %vm225, %v161, 0
        %v230 = vsel %vm225, %v162, 0
        %v233 = vsel %vm225, %v163, 0
        %v236 = vsel %vm225, %v164, 0
        %v239 = vsel %vm225, %v165, 0
        %v242 = vsel %vm225, %v166, 0
        %v245 = vsel %vm225, %v167, 0
        %v248 = vsel %vm225, %v168, 0
        %v251 = vsel %vm225, %v217, 0
        %v254 = vsel %vm225, %v218, 0
        %v257 = vsel %vm225, %v219, 0
        %v260 = vsel %vm225, %v220, 0
        %v263 = vsel %vm225, %v221, 0
        %v266 = vsel %vm225, %v222, 0
        %v269 = vsel %vm225, %v223, 0
        %v272 = vsel %vm225, %v224, 0
        %274 = vmatpush.bf16.xpose.msra.mxu0 %v272
        %275 = vmatpush.bf16.xpose.msra.mxu0 %v269
        %276 = vmatpush.bf16.xpose.msra.mxu0 %v266
        %277 = vmatpush.bf16.xpose.msra.mxu0 %v263
        %278 = vmatpush.bf16.xpose.msra.mxu0 %v260
        %279 = vmatpush.bf16.xpose.msra.mxu0 %v257
        %280 = vmatpush.bf16.xpose.msra.mxu0 %v254
        %281 = vmatpush.bf16.xpose.msra.mxu0 %v251
        %282 = vmatmul.bf16.gmra.mxu0 %v227
        %v283 = vpop.f32.mrf.mxu0
        %v284 = vadd.f32 0.0, %v283
        %v285 = vpop.f32.mrf.mxu0
        %v286 = vadd.f32 0.0, %v285
        %287 = vmatmul.bf16.gmra.mxu0 %v230
        %v288 = vpop.f32.mrf.mxu0
        %v289 = vadd.f32 0.0, %v288
        %v290 = vpop.f32.mrf.mxu0
        %v291 = vadd.f32 0.0, %v290
        %292 = vmatmul.bf16.gmra.mxu0 %v233
        %v293 = vpop.f32.mrf.mxu0
        %v294 = vadd.f32 0.0, %v293
        %v295 = vpop.f32.mrf.mxu0
        %v296 = vadd.f32 0.0, %v295
        %297 = vmatmul.bf16.gmra.mxu0 %v236
        %v298 = vpop.f32.mrf.mxu0
        %v299 = vadd.f32 0.0, %v298
        %v300 = vpop.f32.mrf.mxu0
        %v301 = vadd.f32 0.0, %v300
        %302 = vmatmul.bf16.gmra.mxu0 %v239
        %v303 = vpop.f32.mrf.mxu0
        %v304 = vadd.f32 0.0, %v303
        %v305 = vpop.f32.mrf.mxu0
        %v306 = vadd.f32 0.0, %v305
        %307 = vmatmul.bf16.gmra.mxu0 %v242
        %v308 = vpop.f32.mrf.mxu0
        %v309 = vadd.f32 0.0, %v308
        %v310 = vpop.f32.mrf.mxu0
        %v311 = vadd.f32 0.0, %v310
        %312 = vmatmul.bf16.gmra.mxu0 %v245
        %v313 = vpop.f32.mrf.mxu0
        %v314 = vadd.f32 0.0, %v313
        %v315 = vpop.f32.mrf.mxu0
        %v316 = vadd.f32 0.0, %v315
        %317 = vmatmul.bf16.gmra.mxu0 %v248
        %v318 = vpop.f32.mrf.mxu0
        %v319 = vadd.f32 0.0, %v318
        %v320 = vpop.f32.mrf.mxu0
        %v321 = vadd.f32 0.0, %v320
        %322 = vdwg.mxu0
        %323 = vst [vmem:[%s137] sm:$0xff] %v284
        %324 = vst [vmem:[%s137 + $0x8] sm:$0xff] %v286
        %325 = vst [vmem:[%s137 + $0x10] sm:$0xff] %v289
        %326 = vst [vmem:[%s137 + $0x18] sm:$0xff] %v291
        %327 = vst [vmem:[%s137 + $0x20] sm:$0xff] %v294
        %328 = vst [vmem:[%s137 + $0x28] sm:$0xff] %v296
        %329 = vst [vmem:[%s137 + $0x30] sm:$0xff] %v299
        %330 = vst [vmem:[%s137 + $0x38] sm:$0xff] %v301
        %331 = vst [vmem:[%s137 + $0x40] sm:$0xff] %v304
        %332 = vst [vmem:[%s137 + $0x48] sm:$0xff] %v306
        %333 = vst [vmem:[%s137 + $0x50] sm:$0xff] %v309
        %334 = vst [vmem:[%s137 + $0x58] sm:$0xff] %v311
        %335 = vst [vmem:[%s137 + $0x60] sm:$0xff] %v314
        %336 = vst [vmem:[%s137 + $0x68] sm:$0xff] %v316
        %337 = vst [vmem:[%s137 + $0x70] sm:$0xff] %v319
        %338 = vst [vmem:[%s137 + $0x78] sm:$0xff] %v321
        %s339 = sand.u32 %s71, 1
        %s340 = scalar_lea.sflag [#allocation3], %s339
        %s341 = sand.u32 %s71, 1
        %s342 = smul.addr %s341, 128
        %s343 = scalar_lea.vmem [#allocation2], %s342
        // Predicated region
        $region29: #{tpu_custom_call.1} parent=27 // pred_check
          %p344 = pneg %p81
        $region30: #{tpu_custom_call.1} parent=27 // pred_check_branch
          %346 = sbr.rel (%p344) target = $region32
        $region31: #{tpu_custom_call.1} parent=27 // pred_region
          %s347 = smul.u32 16, %s16
          %349 = vsyncadd %s340, 0
          %s350 = smul.addr %s347, 8
          %s351 = scalar_lea.hbm %s2, %s350
          %s352 = sshll.u32 %s343, 4
          %s353 = int_to_ptr.vmem [resolvable:$true] %s352
          %s354 = sshll.u32 %s351, 4
          %s355 = int_to_ptr.hbm [resolvable:$true] %s354
          %360 = dma.vmem_to_hbm [thread:$0]  %s353, 2048, %s355, %s340, 128, 128, 8
        $region32: #{tpu_custom_call.1} parent=27 // pred_fallthru
          _
      $region28: #{tpu_custom_call.1} parent=5 // pred_fallthru
        _
      %p361 = scmp.le.s32.totalorder 2, %s11
      // Predicated region
      $region33: #{tpu_custom_call.1} parent=5 // pred_check
        %p362 = pneg %p361
      $region34: #{tpu_custom_call.1} parent=5 // pred_check_branch
        %364 = sbr.rel (%p362) target = $region36
      $region35: #{tpu_custom_call.1} parent=5 // pred_region
        %s365 = ssub.s32 %s11, 2
        // Predicated region
        $region37: #{tpu_custom_call.1} parent=35 // pred_check
          %p366 = pneg %p87
        $region38: #{tpu_custom_call.1} parent=35 // pred_check_branch
          %368 = sbr.rel (%p366) target = $region40
        $region39: #{tpu_custom_call.1} parent=35 // pred_region
          %s369 = sand.u32 %s72, 1
          %s370 = scalar_lea.sflag [#allocation3], %s369
          %s371 = sand.u32 %s72, 1
          %s372 = smul.addr %s371, 128
          %s373 = scalar_lea.vmem [#allocation2], %s372
          %375 = dma.done %s370, 2048
        $region40: #{tpu_custom_call.1} parent=35 // pred_fallthru
          _
      $region36: #{tpu_custom_call.1} parent=5 // pred_fallthru
        _
    $region6: #{tpu_custom_call.1} parent=1 // loop_footer
      %s15 = sadd.s32 1, %s11
    $region7: #{tpu_custom_call.1} parent=1 // loop_footer_branch
      %10 = sbr.rel target = $region3
    $region8: #{tpu_custom_call.1} parent=1 // loop_exit
      _
    %376 = vsyncpa [#allocation3], 1
    %s377 = scalar_lea.sflag [#allocation3], 1
    %378 = vsyncpa %s377, 1

</llo_original>
